<compile_context>
chip_gen: v6e
topology: v6e:2x2x1
jax: 0.10.0
libtpu: 0.0.40
codegen_flags: <defaults>
</compile_context>

<pallas_src>
import functools

import jax
import jax.numpy as jnp
from jax.experimental import pallas as pl
from jax.experimental.pallas import tpu as pltpu


# ---------------------------------------------------------------------------
# Per-generation budgets (bytes).
#   block_budget : cap on double-buffered (input block + output block) bytes.
#   vmem_limit   : explicit scoped-VMEM limit (leaves headroom for in-kernel
#                  temporaries; stays well under v7x's 64 MiB physical VMEM).
# ---------------------------------------------------------------------------
def _device_plan():
    try:
        kind = jax.devices()[0].device_kind.lower()
    except Exception:
        kind = ""
    if "v5 lite" in kind or "v5e" in kind or "v5litepod" in kind:
        return {"block_budget": 12 << 20, "vmem_limit": 64 << 20}
    if "v7" in kind:
        return {"block_budget": 16 << 20, "vmem_limit": 44 << 20}
    # v6e / v4 / default (128 MiB physical VMEM, 32 MiB default scoped limit).
    return {"block_budget": 24 << 20, "vmem_limit": 96 << 20}


def _sublane_align(dtype):
    """Sublane alignment for C_t: 8 for 32-bit, 16 for 16-bit, 32 for 8-bit."""
    bits = jnp.dtype(dtype).itemsize * 8
    return max(8, 8 * (32 // bits))


def _plan_dim(dim, target, align):
    """Pick a tile for `dim`.

    Returns (padded_dim, tile) with tile | padded_dim and either
    tile % align == 0 or tile == padded_dim (full-dim block, always legal).
    Pads only when dim > target and dim is not align-divisible (so a huge
    unaligned axis never forces a whole-axis block that could blow VMEM).
    """
    if dim <= target:
        return dim, dim
    dim_p = dim if dim % align == 0 else ((dim + align - 1) // align) * align
    t = max(align, (target // align) * align)
    while dim_p % t:
        t -= align
    return dim_p, t


def _combine_taps(taps, acc_dtype, out_dtype):
    """max / mean over the K pooling taps (each a (B_t, C_t, L_t) tile)."""
    mx = taps[0]
    for t in taps[1:]:
        mx = jnp.maximum(mx, t)
    s = taps[0].astype(acc_dtype)
    for t in taps[1:]:
        s = s + t.astype(acc_dtype)
    avg = s * (1.0 / len(taps))
    return mx.astype(out_dtype), avg.astype(out_dtype)


def _mna_fused_kernel(x_ref, o_ref, *, n_taps, stride, l_t, acc_dtype, tap_mode):
    # x_ref: (B_t, C_t, stride*L_t)    o_ref: (B_t, 2, C_t, L_t)
    if tap_mode == "fused_strided":
        # Ref-strided loads: single load stream, no tile-sized VMEM copies.
        taps = [x_ref[:, :, pl.ds(k, l_t, stride=stride)] for k in range(n_taps)]
    else:  # "fused_slice": load the tile once, de-interleave the value.
        xt = x_ref[...]
        taps = [xt[:, :, k::stride] for k in range(n_taps)]
    mx, avg = _combine_taps(taps, acc_dtype, o_ref.dtype)
    o_ref[:, 0, :, :] = mx          # dense, lane-aligned stores
    o_ref[:, 1, :, :] = avg


def _mna_taps_kernel(*refs, acc_dtype):
    # refs = (tap_0, ..., tap_{K-1}, out); taps: (B_t, C_t, L_t)
    o_ref = refs[-1]
    taps = [r[...] for r in refs[:-1]]
    mx, avg = _combine_taps(taps, acc_dtype, o_ref.dtype)
    o_ref[:, 0, :, :] = mx
    o_ref[:, 1, :, :] = avg


@functools.partial(jax.jit, static_argnums=(1, 2, 3))
def _mna_pool(x, kernel_size, stride, tap_mode):
    K, S = kernel_size, stride
    B, C, L = x.shape
    L_out = (L - K) // S + 1
    itemsize = jnp.dtype(x.dtype).itemsize

    plan = _device_plan()
    c_align = _sublane_align(x.dtype)

    # Double-buffered in+out bytes per (b, c, l_out) element: 2*(S + 2).
    unit = 2 * (S + 2) * itemsize
    budget_elems = max(plan["block_budget"] // unit, 128 * c_align)

    l_target = max(128, min(2048, budget_elems // c_align))
    L_p, L_t = _plan_dim(L_out, l_target, 128)
    c_target = min(512, max(c_align, budget_elems // L_t))
    C_p, C_t = _plan_dim(C, c_target, c_align)

    # Batch tiling: amortize per-step overhead when (C_t, L_t) blocks are small.
    B_t = 1
    rem = budget_elems // (C_t * L_t)
    if rem > 1:
        B_t = max(d for d in range(1, B + 1) if B % d == 0 and d <= rem)

    # Keep >= 2 parallel blocks so v7x's two TensorCores both get work
    # (only worth it when each half still moves a meaningful amount of data).
    if (B // B_t) * (C_p // C_t) * (L_p // L_t) == 1 and \
            B_t * C_t * L_t * itemsize >= (1 << 21):
        if L_t % 256 == 0:
            L_t //= 2
        elif C_t % (2 * c_align) == 0:
            C_t //= 2
        elif B_t % 2 == 0:
            B_t //= 2

    grid = (B // B_t, C_p // C_t, L_p // L_t)

    if jnp.issubdtype(x.dtype, jnp.floating) and jnp.finfo(x.dtype).bits < 32:
        acc_dtype = jnp.float32          # upcast only for sub-f32 floats
    else:
        acc_dtype = x.dtype

    # Rare fallback: pad unaligned *large* dims (padded rows/cols produce
    # garbage outputs that are sliced off below).
    need_pad = (L_p != L_out) or (C_p != C)
    x_work = x
    if need_pad:
        pad_l = max(S * L_p - L, 0)
        x_work = jnp.pad(x, ((0, 0), (0, C_p - C), (0, pad_l)))

    out_shape = jax.ShapeDtypeStruct((B, 2, C_p, L_p), x.dtype)
    out_spec = pl.BlockSpec((B_t, 2, C_t, L_t), lambda b, ci, lj: (b, 0, ci, lj))
    cparams = pltpu.CompilerParams(
        dimension_semantics=("parallel", "parallel", "parallel"),
        vmem_limit_bytes=plan["vmem_limit"])
    cost = pl.CostEstimate(
        flops=2 * K * B * C_p * L_p,
        transcendentals=0,
        bytes_accessed=(B * C_p * S * L_p + 2 * B * C_p * L_p) * itemsize)

    if tap_mode in ("fused_strided", "fused_slice"):
        # Fused path: read x once, write the output once (2 HBM passes).
        xin = x_work
        if (S * L_t) % 128 != 0 and xin.shape[-1] != S * L_t:
            # Only for small, unaligned L_out with an odd tail: a full-dim
            # block is required for legality, so trim the tail (cheap here).
            xin = xin[..., : S * L_t]
        kern = functools.partial(
            _mna_fused_kernel, n_taps=K, stride=S, l_t=L_t,
            acc_dtype=acc_dtype, tap_mode=tap_mode)
        out = pl.pallas_call(
            kern,
            out_shape=out_shape,
            grid=grid,
            in_specs=[pl.BlockSpec((B_t, C_t, S * L_t),
                                   lambda b, ci, lj: (b, ci, lj))],
            out_specs=out_spec,
            compiler_params=cparams,
            cost_estimate=cost,
        )(xin)
    else:
        # Fallback: XLA extracts the K strided taps (one extra HBM pass); the
        # kernel then only sees dense, lane-aligned (B_t, C_t, L_t) tiles.
        taps = [x_work[..., k: k + S * L_p: S] for k in range(K)]
        kern = functools.partial(_mna_taps_kernel, acc_dtype=acc_dtype)
        tap_spec = pl.BlockSpec((B_t, C_t, L_t), lambda b, ci, lj: (b, ci, lj))
        out = pl.pallas_call(
            kern,
            out_shape=out_shape,
            grid=grid,
            in_specs=[tap_spec] * K,
            out_specs=out_spec,
            compiler_params=cparams,
            cost_estimate=cost,
        )(*taps)

    if need_pad:
        out = out[:, :, :C, :L_out]
    # (B, 2, C, L_out) -> (B, 2C, L_out) is a free row-major view; channels
    # come out ordered [max_0..C-1, avg_0..C-1], matching torch.concat(dim=1).
    return out.reshape(B, 2 * C, L_out)


def _reference(x, kernel_size=2, stride=2):
    """Pure-JAX reference mirroring torch MaxPool1d/AvgPool1d + concat."""
    B, C, L = x.shape
    L_out = (L - kernel_size) // stride + 1
    taps = [x[..., k:k + stride * L_out:stride] for k in range(kernel_size)]
    xw = jnp.stack(taps, axis=-1)
    return jnp.concatenate([jnp.max(xw, -1), jnp.mean(xw, -1)], axis=1)


_PROBE_SHAPES = ((2, 4, 16), (2, 16, 2048))


@functools.lru_cache(maxsize=None)
def _best_tap_mode(dtype_name):
    """Pick the fastest tap-extraction mode the local Mosaic build supports,
    verified numerically on small probe shapes *in the actual dtype*.
    Ref-strided loads are tried first (no tile-sized VMEM copies)."""
    dtype = jnp.dtype(dtype_name)
    tol = 1e-6 if dtype == jnp.float32 else 1e-2
    for mode in ("fused_strided", "fused_slice"):
        try:
            ok = True
            for i, shape in enumerate(_PROBE_SHAPES):
                xp = jax.random.normal(jax.random.PRNGKey(100 + i), shape,
                                       dtype=jnp.float32).astype(dtype)
                got = jax.block_until_ready(_mna_pool(xp, 2, 2, mode))
                ref = _reference(xp.astype(jnp.float32)).astype(dtype)
                if not jnp.allclose(got.astype(jnp.float32),
                                    ref.astype(jnp.float32),
                                    atol=tol, rtol=tol):
                    ok = False
                    break
            if ok:
                return mode
        except Exception:
            continue
    return "prestrided"


def mna_pooling_1d(x, kernel_size=2, stride=2, padding=0):
    """MNAPooling1D forward: (B, C, L) -> (B, 2*C, L_out)."""
    if padding != 0:
        # TODO(synk): padding > 0 needs -inf pad for max / count-aware avg.
        raise NotImplementedError("padding != 0 not implemented")
    if kernel_size != stride:
        # TODO(synk): overlapping windows need element-offset (overlapping) blocks.
        raise NotImplementedError("only kernel_size == stride is implemented")
    if not jnp.issubdtype(x.dtype, jnp.floating):
        # torch AvgPool1d rejects integer inputs too; rounding is undefined.
        raise NotImplementedError("only floating dtypes are supported")
    mode = _best_tap_mode(jnp.dtype(x.dtype).name)
    try:
        return _mna_pool(x, kernel_size, stride, mode)
    except Exception:
        if mode == "prestrided":
            raise
        # A mode that lowered for the probe shapes may still fail for this
        # shape; fall back to XLA-side taps, which always lower.
        return _mna_pool(x, kernel_size, stride, "prestrided")


if __name__ == "__main__":
    key = jax.random.PRNGKey(0)
    # Small NCL input matching the module, plus an aligned case that exercises
    # the (B_t, C_t, L_t) blocking path.
    for i, (B, C, L) in enumerate(((2, 4, 16), (2, 16, 2048))):
        x = jax.random.normal(jax.random.fold_in(key, i), (B, C, L),
                              dtype=jnp.float32)
        out = jax.block_until_ready(mna_pooling_1d(x))
        ref = _reference(x)
        assert out.shape == (B, 2 * C, L // 2), out.shape
        assert jnp.allclose(out, ref, atol=1e-6, rtol=1e-6), \
            float(jnp.max(jnp.abs(out - ref)))
    print("KERNEL_OK")
</pallas_src>

<mosaic_0001>
module attributes {stable_mosaic.version = 11 : i64} {
  func.func @_mna_fused_kernel(%arg0: i32, %arg1: i32, %arg2: i32, %arg3: memref<2x4x16xf32, #tpu.memory_space<vmem>>, %arg4: memref<2x2x4x8xf32, #tpu.memory_space<vmem>>) attributes {dimension_semantics = [#tpu.dimension_semantics<parallel>, #tpu.dimension_semantics<parallel>, #tpu.dimension_semantics<parallel>], iteration_bounds = array<i64: 1, 1, 1>, scalar_prefetch = 0 : i64, scratch_operands = 0 : i64, tpu.core_type = #tpu.core_type<tc>, window_params = [{transform_indices = @transform_0, window_bounds = array<i64: 2, 4, 16>}, {transform_indices = @transform_1, window_bounds = array<i64: 2, 2, 4, 8>}]} {
    %c0 = arith.constant 0 : index
    %c0_0 = arith.constant 0 : index
    %c0_1 = arith.constant 0 : index
    %0 = tpu.strided_load %arg3[%c0, %c0_0, %c0_1] {strides = array<i32: 1, 1, 2>} : memref<2x4x16xf32, #tpu.memory_space<vmem>>, vector<2x4x8xf32>
    %c0_2 = arith.constant 0 : index
    %c0_3 = arith.constant 0 : index
    %c1 = arith.constant 1 : index
    %1 = tpu.strided_load %arg3[%c0_2, %c0_3, %c1] {strides = array<i32: 1, 1, 2>} : memref<2x4x16xf32, #tpu.memory_space<vmem>>, vector<2x4x8xf32>
    %2 = arith.maximumf %0, %1 : vector<2x4x8xf32>
    %3 = arith.addf %0, %1 : vector<2x4x8xf32>
    %cst = arith.constant 5.000000e-01 : f32
    %4 = vector.broadcast %cst : f32 to vector<2x4x8xf32>
    %5 = arith.mulf %3, %4 : vector<2x4x8xf32>
    %c0_4 = arith.constant 0 : index
    %c0_5 = arith.constant 0 : index
    %c0_6 = arith.constant 0 : index
    %c0_7 = arith.constant 0 : index
    %6 = vector.load %arg4[%c0_4, %c0_5, %c0_6, %c0_7] : memref<2x2x4x8xf32, #tpu.memory_space<vmem>>, vector<2x1x4x8xf32>
    %7 = vector.shape_cast %6 : vector<2x1x4x8xf32> to vector<2x4x8xf32>
    %8 = vector.shape_cast %2 : vector<2x4x8xf32> to vector<2x1x4x8xf32>
    tpu.vector_store %arg4[%c0_4, %c0_5, %c0_6, %c0_7], %8 {strides = array<i32>} : memref<2x2x4x8xf32, #tpu.memory_space<vmem>>, vector<2x1x4x8xf32>,
    %c0_8 = arith.constant 0 : index
    %c1_9 = arith.constant 1 : index
    %c0_10 = arith.constant 0 : index
    %c0_11 = arith.constant 0 : index
    %9 = vector.load %arg4[%c0_8, %c1_9, %c0_10, %c0_11] : memref<2x2x4x8xf32, #tpu.memory_space<vmem>>, vector<2x1x4x8xf32>
    %10 = vector.shape_cast %9 : vector<2x1x4x8xf32> to vector<2x4x8xf32>
    %11 = vector.shape_cast %5 : vector<2x4x8xf32> to vector<2x1x4x8xf32>
    tpu.vector_store %arg4[%c0_8, %c1_9, %c0_10, %c0_11], %11 {strides = array<i32>} : memref<2x2x4x8xf32, #tpu.memory_space<vmem>>, vector<2x1x4x8xf32>,
    return
  }
  func.func @transform_0(%arg0: i32, %arg1: i32, %arg2: i32) -> (i32, i32, i32) {
    %c0_i32 = arith.constant 0 : i32
    return %arg0, %arg1, %arg2 : i32, i32, i32
  }
  func.func @transform_1(%arg0: i32, %arg1: i32, %arg2: i32) -> (i32, i32, i32, i32) {
    %c0_i32 = arith.constant 0 : i32
    %c0_i32_0 = arith.constant 0 : i32
    return %arg0, %c0_i32, %arg1, %arg2 : i32, i32, i32, i32
  }
}

module attributes {stable_mosaic.version = 11 : i64} {
  func.func @_mna_taps_kernel(%arg0: i32, %arg1: i32, %arg2: i32, %arg3: memref<2x4x8xf32, #tpu.memory_space<vmem>>, %arg4: memref<2x4x8xf32, #tpu.memory_space<vmem>>, %arg5: memref<2x2x4x8xf32, #tpu.memory_space<vmem>>) attributes {dimension_semantics = [#tpu.dimension_semantics<parallel>, #tpu.dimension_semantics<parallel>, #tpu.dimension_semantics<parallel>], iteration_bounds = array<i64: 1, 1, 1>, scalar_prefetch = 0 : i64, scratch_operands = 0 : i64, tpu.core_type = #tpu.core_type<tc>, window_params = [{transform_indices = @transform_0, window_bounds = array<i64: 2, 4, 8>}, {transform_indices = @transform_1, window_bounds = array<i64: 2, 4, 8>}, {transform_indices = @transform_2, window_bounds = array<i64: 2, 2, 4, 8>}]} {
    %c0 = arith.constant 0 : index
    %c0_0 = arith.constant 0 : index
    %c0_1 = arith.constant 0 : index
    %0 = vector.load %arg3[%c0, %c0_0, %c0_1] : memref<2x4x8xf32, #tpu.memory_space<vmem>>, vector<2x4x8xf32>
    %c0_2 = arith.constant 0 : index
    %c0_3 = arith.constant 0 : index
    %c0_4 = arith.constant 0 : index
    %1 = vector.load %arg4[%c0_2, %c0_3, %c0_4] : memref<2x4x8xf32, #tpu.memory_space<vmem>>, vector<2x4x8xf32>
    %2 = arith.maximumf %0, %1 : vector<2x4x8xf32>
    %3 = arith.addf %0, %1 : vector<2x4x8xf32>
    %cst = arith.constant 5.000000e-01 : f32
    %4 = vector.broadcast %cst : f32 to vector<2x4x8xf32>
    %5 = arith.mulf %3, %4 : vector<2x4x8xf32>
    %c0_5 = arith.constant 0 : index
    %c0_6 = arith.constant 0 : index
    %c0_7 = arith.constant 0 : index
    %c0_8 = arith.constant 0 : index
    %6 = vector.load %arg5[%c0_5, %c0_6, %c0_7, %c0_8] : memref<2x2x4x8xf32, #tpu.memory_space<vmem>>, vector<2x1x4x8xf32>
    %7 = vector.shape_cast %6 : vector<2x1x4x8xf32> to vector<2x4x8xf32>
    %8 = vector.shape_cast %2 : vector<2x4x8xf32> to vector<2x1x4x8xf32>
    tpu.vector_store %arg5[%c0_5, %c0_6, %c0_7, %c0_8], %8 {strides = array<i32>} : memref<2x2x4x8xf32, #tpu.memory_space<vmem>>, vector<2x1x4x8xf32>,
    %c0_9 = arith.constant 0 : index
    %c1 = arith.constant 1 : index
    %c0_10 = arith.constant 0 : index
    %c0_11 = arith.constant 0 : index
    %9 = vector.load %arg5[%c0_9, %c1, %c0_10, %c0_11] : memref<2x2x4x8xf32, #tpu.memory_space<vmem>>, vector<2x1x4x8xf32>
    %10 = vector.shape_cast %9 : vector<2x1x4x8xf32> to vector<2x4x8xf32>
    %11 = vector.shape_cast %5 : vector<2x4x8xf32> to vector<2x1x4x8xf32>
    tpu.vector_store %arg5[%c0_9, %c1, %c0_10, %c0_11], %11 {strides = array<i32>} : memref<2x2x4x8xf32, #tpu.memory_space<vmem>>, vector<2x1x4x8xf32>,
    return
  }
  func.func @transform_0(%arg0: i32, %arg1: i32, %arg2: i32) -> (i32, i32, i32) {
    %c0_i32 = arith.constant 0 : i32
    return %arg0, %arg1, %arg2 : i32, i32, i32
  }
  func.func @transform_1(%arg0: i32, %arg1: i32, %arg2: i32) -> (i32, i32, i32) {
    %c0_i32 = arith.constant 0 : i32
    return %arg0, %arg1, %arg2 : i32, i32, i32
  }
  func.func @transform_2(%arg0: i32, %arg1: i32, %arg2: i32) -> (i32, i32, i32, i32) {
    %c0_i32 = arith.constant 0 : i32
    %c0_i32_0 = arith.constant 0 : i32
    return %arg0, %c0_i32, %arg1, %arg2 : i32, i32, i32, i32
  }
}

</mosaic_0001>

<llo_original>
// kernel: _mna_pool.1
$region0: #{_mna_pool.1}
  #allocation0 [shape = 'u32[]', space=smem, size = 0x4, offset = 0x4, fixed_abs, tag = 'smem constant byte address 0x4 - core index']
  #allocation1 [shape = 'u32[144,128]{1,0:T(1,128)}', space=vmem, size = 0x12000, scoped, tag = 'internal scratch']
  %s0 = inlined_call_operand.vmem [shape: f32[2,4,8], index: 0, kind: input, shape index: {}]
  %s1 = inlined_call_operand.vmem [shape: f32[2,4,8], index: 1, kind: input, shape index: {}]
  %s2 = inlined_call_operand.hbm [shape: f32[2,2,4,8], index: 2, kind: output, shape index: {}]
  %s3 = sld [smem:[#allocation0]]
  $region18: #{_mna_pool.1} parent=0
    _
  %s5 = ssub.s32 1, %s3
  %s6 = scalar_select 0, %s5, %s3
  $region1: #{_mna_pool.1} parent=0
    #allocation2 [shape = 'u8[8192]{0}', space=vmem, size = 0x2000, scoped, tag = 'output window, operand 0, single buffered']
    #allocation3 [shape = 's32[1]{0}', space=sflag, size = 0x4, scoped, tag = 'scoped memory for _mna_pool.1']
    %7 = vsyncpa [#allocation3], 0
    // Predicated region
    $region2: #{_mna_pool.1} parent=1 // pred_check
      _
    $region3: #{_mna_pool.1} parent=1 // pred_check_branch
      %9 = sbr.rel (0) target = $region5
    $region4: #{_mna_pool.1} parent=1 // pred_region
      _
    $region5: #{_mna_pool.1} parent=1 // pred_fallthru
      _
    // Predicated region
    $region6: #{_mna_pool.1} parent=1 // pred_check
      _
    $region7: #{_mna_pool.1} parent=1 // pred_check_branch
      %11 = sbr.rel (0) target = $region9
    $region8: #{_mna_pool.1} parent=1 // pred_region
      _
    $region9: #{_mna_pool.1} parent=1 // pred_fallthru
      _
    %v12 = vld [vmem:[%s0] sm:$0xf]
    %v13 = vld [vmem:[%s0 + $0x4] sm:$0xf]
    %v14 = vld [vmem:[%s1] sm:$0xf]
    %v15 = vld [vmem:[%s1 + $0x4] sm:$0xf]
    %v16 = vmax.f32 %v12, %v14
    %v17 = vmax.f32 %v13, %v15
    %v18 = vadd.f32 %v12, %v14
    %v19 = vadd.f32 %v13, %v15
    %v20 = vmul.f32 %v18, 0.5
    %v21 = vmul.f32 %v19, 0.5
    %vm22 = vcmask 60416
    %23 = vst.msk [vmem:[#allocation2] sm:$0xf] %vm22, %v16
    %24 = vst.msk [vmem:[#allocation2 + $0x8] sm:$0xf] %vm22, %v17
    %s25 = scalar_lea.vmem [#allocation2], 4
    %26 = vst.msk [vmem:[%s25] sm:$0xf] %vm22, %v20
    %27 = vst.msk [vmem:[%s25 + $0x8] sm:$0xf] %vm22, %v21
    // Predicated region
    $region10: #{_mna_pool.1} parent=1 // pred_check
      _
    $region11: #{_mna_pool.1} parent=1 // pred_check_branch
      %29 = sbr.rel (0) target = $region13
    $region12: #{_mna_pool.1} parent=1 // pred_region
      %s31 = ssub.s32 256, 256
      %32 = vsyncadd [#allocation3], %s31
      %s33 = sshll.u32 [#allocation2], 4
      %s34 = int_to_ptr.vmem [resolvable:$true] %s33
      %39 = dma.vmem_to_hbm [thread:$0]  %s34, 256, %s2, [#allocation3], 64, 64, 4
    $region13: #{_mna_pool.1} parent=1 // pred_fallthru
      _
    // Predicated region
    $region14: #{_mna_pool.1} parent=1 // pred_check
      _
    $region15: #{_mna_pool.1} parent=1 // pred_check_branch
      %41 = sbr.rel (0) target = $region17
    $region16: #{_mna_pool.1} parent=1 // pred_region
      %42 = dma.done [#allocation3], 256
    $region17: #{_mna_pool.1} parent=1 // pred_fallthru
      _
    %43 = vsyncpa [#allocation3], 1

</llo_original>
